<compile_context>
chip_gen: v5e
topology: v5e:2x2
jax: 0.10.0
libtpu: 0.0.40
codegen_flags: <defaults>
</compile_context>

<pallas_src>
import functools

import jax
import jax.numpy as jnp
from jax import lax
from jax.experimental import pallas as pl
from jax.experimental.pallas import tpu as pltpu

T = 16
TAU = 2.0          # NonSpikingLIFNode tau; the kernel exploits tau == 2 (power-of-two weights)
V_THRESHOLD = 1.0  # IFNode threshold (spikingjelly default); hard reset to v_reset = 0


def _round_up(x, m):
    return (x + m - 1) // m * m


def _cdiv(a, b):
    return -(-a // b)


def dqsn_kernel(x_ref, w1_ref, b1_ref, w2_ref, b2_ref, out_ref, *, chunk_rows):
    """One batch tile.  Packed / lane-dense shapes (P = lane-packing factor):
         x_ref  : (TR, P*I)          w1_ref : (P*I, P*H)      block-diag kron(I_P, w1)
         b1_ref : (1, P*H)           w2_ref : (P*H, P*O_pad)  block-diag kron(I_P, w2_pad)
         b2_ref : (1, P*O_pad)       pre-scaled by (1 - 2^-T)
         out_ref: (TR, P*O_pad)
    """
    tile_rows = x_ref.shape[0]
    n_chunks = tile_rows // chunk_rows
    scale = float(0.5 ** T)   # = (1/tau) * (1 - 1/tau)^(T-1) for tau = 2; exact power of two

    def chunk_body(c, carry):
        r0 = pl.multiple_of(c * chunk_rows, chunk_rows)
        rows = pl.ds(r0, chunk_rows)

        # Linear1 once (x is identical at every timestep), MXU, f32 accumulation
        # (it feeds a hard threshold, so no bf16 here).
        c1 = (jnp.dot(x_ref[rows, :], w1_ref[...],
                      preferred_element_type=jnp.float32) + b1_ref[...])

        # T-step IFNode -> LIF chain: pure VPU, lane-dense; working set (c1, v1, s2a)
        # sized to stay inside the 64-entry vreg file (no per-step spill round-trips).
        v1 = jnp.zeros_like(c1)
        s2a = jnp.zeros_like(c1)
        for t in range(T):                                   # statically unrolled
            v1 = v1 + c1
            fired = v1 >= V_THRESHOLD
            v1 = jnp.where(fired, 0.0, v1)                   # IFNode hard reset to 0
            # LIF recurrence folded onto the spike train with exact 2^t weights.
            s2a = s2a + jnp.where(fired, float(2 ** t), 0.0)

        # Exact collapse of the 16 per-step (spike @ w2 + b2) -> LIF updates:
        #   v2_T = (2^-T * s2a) @ w2 + (1 - 2^-T) * b2   (bias factor folded into b2_ref).
        out_ref[rows, :] = (
            jnp.dot(s2a * scale, w2_ref[...], preferred_element_type=jnp.float32)
            + b2_ref[...])
        return carry

    lax.fori_loop(0, n_chunks, chunk_body, 0)


def _plan_tiling(rows, kd, ld, nd):
    """Pick (chunk_rows, tile_rows, grid) in packed-row units."""
    lanes_per_row = _cdiv(ld, 128)
    # 3 loop carries * (cr/8 sublanes) * lanes_per_row vregs <= ~48 of the 64 vregs.
    cr = max(8, ((128 // max(1, lanes_per_row)) // 8) * 8)
    cr = min(cr, _round_up(rows, 8))
    # >= 2 grid tiles when there is enough work (v7x megacore); tiles of <= ~512 rows;
    # padding waste bounded by ~one chunk per tile.
    n_tiles = max(2, _cdiv(rows, 512))
    tr = _round_up(_cdiv(rows, n_tiles), cr)
    # Keep per-tile VMEM footprint (double-buffered x/out tiles + resident weights, two
    # buffers each by Pallas default) under a v5e-safe scoped-VMEM budget.
    budget = 12 * 1024 * 1024
    weight_bytes = 2 * 4 * (kd * ld + ld + ld * nd + nd)
    per_row_bytes = 2 * 4 * (kd + nd)
    tr_cap = max(cr, ((budget - weight_bytes) // per_row_bytes) // cr * cr)
    tr = max(cr, min(tr, tr_cap))
    grid = _cdiv(rows, tr)
    return cr, tr, grid


def dqsn_forward(x, w1, b1, w2, b2):
    """x: (B, I); w1: (I, H); b1: (H,); w2: (H, O); b2: (O,).  Returns (B, O) float32."""
    B, I = x.shape
    H, O = w2.shape

    # Lane-packing factor: fold P batch rows into the lane dim so the time-loop state is
    # lane-dense when H < 128 (H=32 -> P=4 -> state shape (rows, 128), full lane fill).
    P = 128 // H if (H < 128 and 128 % H == 0) else 1

    O_pad = _round_up(max(O, 128), 128)        # lane-dense output -> unmasked vector stores
    Kd, LD, Nd = P * I, P * H, P * O_pad

    rows = _cdiv(B, P)
    cr, tr, grid = _plan_tiling(rows, Kd, LD, Nd)
    rows_pad = grid * tr
    B_pad = rows_pad * P

    f32 = jnp.float32
    x_p = x.astype(f32)
    if B_pad != B:
        x_p = jnp.pad(x_p, ((0, B_pad - B), (0, 0)))
    x_packed = x_p.reshape(rows_pad, Kd)

    # Block-diagonal weights keep the P lane-packed rows independent (packing is exact).
    eye_p = jnp.eye(P, dtype=f32)
    w1_bd = jnp.kron(eye_p, w1.astype(f32))                        # (Kd, LD)
    b1_ld = jnp.tile(b1.astype(f32), P).reshape(1, LD)
    w2_pad = jnp.pad(w2.astype(f32), ((0, 0), (0, O_pad - O)))
    w2_bd = jnp.kron(eye_p, w2_pad)                                # (LD, Nd)
    bias_coef = 1.0 - 0.5 ** T            # = sum_t (1/tau) (1 - 1/tau)^(T-1-t) for tau = 2
    b2_ld = (bias_coef * jnp.tile(jnp.pad(b2.astype(f32), (0, O_pad - O)), P)).reshape(1, Nd)

    kernel = functools.partial(dqsn_kernel, chunk_rows=cr)

    out_packed = pl.pallas_call(
        kernel,
        out_shape=jax.ShapeDtypeStruct((rows_pad, Nd), jnp.float32),
        grid_spec=pltpu.PrefetchScalarGridSpec(
            num_scalar_prefetch=0,
            grid=(grid,),
            in_specs=[
                pl.BlockSpec((tr, Kd), lambda i: (i, 0)),      # x: pipelined over batch tiles
                pl.BlockSpec((Kd, LD), lambda i: (0, 0)),      # w1 (block-diag): resident
                pl.BlockSpec((1, LD), lambda i: (0, 0)),       # b1: resident
                pl.BlockSpec((LD, Nd), lambda i: (0, 0)),      # w2 (block-diag): resident
                pl.BlockSpec((1, Nd), lambda i: (0, 0)),       # b2 (pre-scaled): resident
            ],
            out_specs=pl.BlockSpec((tr, Nd), lambda i: (i, 0)),
        ),
        compiler_params=pltpu.CompilerParams(
            dimension_semantics=("parallel",),   # shards batch tiles across TCs on v7x
        ),
    )(x_packed, w1_bd, b1_ld, w2_bd, b2_ld)

    out = out_packed.reshape(B_pad, O_pad)       # undo the lane packing (wrapper-side)
    return out[:B, :O]


def dqsn_reference(x, w1, b1, w2, b2):
    """Pure-JAX reference with the original per-step semantics."""
    c1 = x @ w1 + b1
    v1 = jnp.zeros_like(c1)
    v2 = jnp.zeros((x.shape[0], w2.shape[1]), jnp.float32)
    for _ in range(T):
        v1 = v1 + c1
        spike = (v1 >= V_THRESHOLD).astype(jnp.float32)
        v1 = v1 * (1.0 - spike)
        h2 = spike @ w2 + b2
        v2 = v2 + (h2 - v2) / TAU
    return v2


def init_linear(key, fan_in, fan_out):
    # Mirrors PyTorch Linear default init: U(-1/sqrt(fan_in), 1/sqrt(fan_in)).
    kw, kb = jax.random.split(key)
    bound = 1.0 / (fan_in ** 0.5)
    w = jax.random.uniform(kw, (fan_in, fan_out), jnp.float32, -bound, bound)
    b = jax.random.uniform(kb, (fan_out,), jnp.float32, -bound, bound)
    return w, b


if __name__ == "__main__":
    batch, input_size, hidden_size, output_size = 2, 4, 32, 2

    key = jax.random.PRNGKey(0)
    kx, k1, k2 = jax.random.split(key, 3)

    x = jax.random.normal(kx, (batch, input_size), jnp.float32)
    w1, b1 = init_linear(k1, input_size, hidden_size)
    w2, b2 = init_linear(k2, hidden_size, output_size)

    out = dqsn_forward(x, w1, b1, w2, b2)
    out = jax.block_until_ready(out)

    ref = dqsn_reference(x, w1, b1, w2, b2)
    assert out.shape == (batch, output_size)
    assert jnp.allclose(out, ref, atol=1e-5, rtol=1e-5), (out, ref)

    print("KERNEL_OK")
</pallas_src>

<mosaic_0001>
module attributes {stable_mosaic.version = 11 : i64} {
  func.func @dqsn_kernel(%arg0: i32, %arg1: memref<8x16xf32, #tpu.memory_space<vmem>>, %arg2: memref<16x128xf32, #tpu.memory_space<vmem>>, %arg3: memref<1x128xf32, #tpu.memory_space<vmem>>, %arg4: memref<128x512xf32, #tpu.memory_space<vmem>>, %arg5: memref<1x512xf32, #tpu.memory_space<vmem>>, %arg6: memref<8x512xf32, #tpu.memory_space<vmem>>) attributes {dimension_semantics = [#tpu.dimension_semantics<parallel>], iteration_bounds = array<i64: 1>, scalar_prefetch = 0 : i64, scratch_operands = 0 : i64, tpu.core_type = #tpu.core_type<tc>, window_params = [{transform_indices = @transform_0, window_bounds = array<i64: 8, 16>}, {pipeline_mode = #tpu.pipeline_mode<synchronous>, transform_indices = @transform_1, window_bounds = array<i64: 16, 128>}, {pipeline_mode = #tpu.pipeline_mode<synchronous>, transform_indices = @transform_2, window_bounds = array<i64: 1, 128>}, {pipeline_mode = #tpu.pipeline_mode<synchronous>, transform_indices = @transform_3, window_bounds = array<i64: 128, 512>}, {pipeline_mode = #tpu.pipeline_mode<synchronous>, transform_indices = @transform_4, window_bounds = array<i64: 1, 512>}, {transform_indices = @transform_5, window_bounds = array<i64: 8, 512>}]} {
    %c0_i32 = arith.constant 0 : i32
    %c8_i32 = arith.constant 8 : i32
    %0 = arith.muli %c0_i32, %c8_i32 : i32
    %1 = tpu.assume_multiple %0, 8 : i32
    %2 = arith.index_cast %1 : i32 to index
    %c0 = arith.constant 0 : index
    %3 = vector.load %arg1[%2, %c0] : memref<8x16xf32, #tpu.memory_space<vmem>>, vector<8x16xf32>
    %c0_0 = arith.constant 0 : index
    %c0_1 = arith.constant 0 : index
    %4 = vector.load %arg2[%c0_0, %c0_1] : memref<16x128xf32, #tpu.memory_space<vmem>>, vector<16x128xf32>
    %cst = arith.constant dense<0.000000e+00> : vector<8x128xf32>
    %5 = tpu.matmul %3, %4, %cst {dimension_numbers = #tpu.dot_dimension_numbers<[1], [0], [0], [1], [0, 0, 1, 1], [], []>} : vector<8x16xf32>, vector<16x128xf32>, vector<8x128xf32> -> vector<8x128xf32>
    %c0_2 = arith.constant 0 : index
    %c0_3 = arith.constant 0 : index
    %6 = vector.load %arg3[%c0_2, %c0_3] : memref<1x128xf32, #tpu.memory_space<vmem>>, vector<1x128xf32>
    %7 = vector.broadcast %6 : vector<1x128xf32> to vector<8x128xf32>
    %8 = arith.addf %5, %7 : vector<8x128xf32>
    %cst_4 = arith.constant 0.000000e+00 : f32
    %9 = vector.broadcast %cst_4 : f32 to vector<8x128xf32>
    %cst_5 = arith.constant 0.000000e+00 : f32
    %10 = vector.broadcast %cst_5 : f32 to vector<8x128xf32>
    %11 = arith.addf %9, %8 : vector<8x128xf32>
    %cst_6 = arith.constant 1.000000e+00 : f32
    %12 = vector.broadcast %cst_6 : f32 to vector<8x128xf32>
    %13 = arith.cmpf oge, %11, %12 : vector<8x128xf32>
    %cst_7 = arith.constant 0.000000e+00 : f32
    %14 = vector.broadcast %cst_7 : f32 to vector<8x128xf32>
    %15 = arith.select %13, %14, %11 : vector<8x128xi1>, vector<8x128xf32>
    %cst_8 = arith.constant 1.000000e+00 : f32
    %cst_9 = arith.constant 0.000000e+00 : f32
    %16 = vector.broadcast %cst_8 : f32 to vector<8x128xf32>
    %17 = vector.broadcast %cst_9 : f32 to vector<8x128xf32>
    %18 = arith.select %13, %16, %17 : vector<8x128xi1>, vector<8x128xf32>
    %19 = arith.addf %10, %18 : vector<8x128xf32>
    %20 = arith.addf %15, %8 : vector<8x128xf32>
    %cst_10 = arith.constant 1.000000e+00 : f32
    %21 = vector.broadcast %cst_10 : f32 to vector<8x128xf32>
    %22 = arith.cmpf oge, %20, %21 : vector<8x128xf32>
    %cst_11 = arith.constant 0.000000e+00 : f32
    %23 = vector.broadcast %cst_11 : f32 to vector<8x128xf32>
    %24 = arith.select %22, %23, %20 : vector<8x128xi1>, vector<8x128xf32>
    %cst_12 = arith.constant 2.000000e+00 : f32
    %cst_13 = arith.constant 0.000000e+00 : f32
    %25 = vector.broadcast %cst_12 : f32 to vector<8x128xf32>
    %26 = vector.broadcast %cst_13 : f32 to vector<8x128xf32>
    %27 = arith.select %22, %25, %26 : vector<8x128xi1>, vector<8x128xf32>
    %28 = arith.addf %19, %27 : vector<8x128xf32>
    %29 = arith.addf %24, %8 : vector<8x128xf32>
    %cst_14 = arith.constant 1.000000e+00 : f32
    %30 = vector.broadcast %cst_14 : f32 to vector<8x128xf32>
    %31 = arith.cmpf oge, %29, %30 : vector<8x128xf32>
    %cst_15 = arith.constant 0.000000e+00 : f32
    %32 = vector.broadcast %cst_15 : f32 to vector<8x128xf32>
    %33 = arith.select %31, %32, %29 : vector<8x128xi1>, vector<8x128xf32>
    %cst_16 = arith.constant 4.000000e+00 : f32
    %cst_17 = arith.constant 0.000000e+00 : f32
    %34 = vector.broadcast %cst_16 : f32 to vector<8x128xf32>
    %35 = vector.broadcast %cst_17 : f32 to vector<8x128xf32>
    %36 = arith.select %31, %34, %35 : vector<8x128xi1>, vector<8x128xf32>
    %37 = arith.addf %28, %36 : vector<8x128xf32>
    %38 = arith.addf %33, %8 : vector<8x128xf32>
    %cst_18 = arith.constant 1.000000e+00 : f32
    %39 = vector.broadcast %cst_18 : f32 to vector<8x128xf32>
    %40 = arith.cmpf oge, %38, %39 : vector<8x128xf32>
    %cst_19 = arith.constant 0.000000e+00 : f32
    %41 = vector.broadcast %cst_19 : f32 to vector<8x128xf32>
    %42 = arith.select %40, %41, %38 : vector<8x128xi1>, vector<8x128xf32>
    %cst_20 = arith.constant 8.000000e+00 : f32
    %cst_21 = arith.constant 0.000000e+00 : f32
    %43 = vector.broadcast %cst_20 : f32 to vector<8x128xf32>
    %44 = vector.broadcast %cst_21 : f32 to vector<8x128xf32>
    %45 = arith.select %40, %43, %44 : vector<8x128xi1>, vector<8x128xf32>
    %46 = arith.addf %37, %45 : vector<8x128xf32>
    %47 = arith.addf %42, %8 : vector<8x128xf32>
    %cst_22 = arith.constant 1.000000e+00 : f32
    %48 = vector.broadcast %cst_22 : f32 to vector<8x128xf32>
    %49 = arith.cmpf oge, %47, %48 : vector<8x128xf32>
    %cst_23 = arith.constant 0.000000e+00 : f32
    %50 = vector.broadcast %cst_23 : f32 to vector<8x128xf32>
    %51 = arith.select %49, %50, %47 : vector<8x128xi1>, vector<8x128xf32>
    %cst_24 = arith.constant 1.600000e+01 : f32
    %cst_25 = arith.constant 0.000000e+00 : f32
    %52 = vector.broadcast %cst_24 : f32 to vector<8x128xf32>
    %53 = vector.broadcast %cst_25 : f32 to vector<8x128xf32>
    %54 = arith.select %49, %52, %53 : vector<8x128xi1>, vector<8x128xf32>
    %55 = arith.addf %46, %54 : vector<8x128xf32>
    %56 = arith.addf %51, %8 : vector<8x128xf32>
    %cst_26 = arith.constant 1.000000e+00 : f32
    %57 = vector.broadcast %cst_26 : f32 to vector<8x128xf32>
    %58 = arith.cmpf oge, %56, %57 : vector<8x128xf32>
    %cst_27 = arith.constant 0.000000e+00 : f32
    %59 = vector.broadcast %cst_27 : f32 to vector<8x128xf32>
    %60 = arith.select %58, %59, %56 : vector<8x128xi1>, vector<8x128xf32>
    %cst_28 = arith.constant 3.200000e+01 : f32
    %cst_29 = arith.constant 0.000000e+00 : f32
    %61 = vector.broadcast %cst_28 : f32 to vector<8x128xf32>
    %62 = vector.broadcast %cst_29 : f32 to vector<8x128xf32>
    %63 = arith.select %58, %61, %62 : vector<8x128xi1>, vector<8x128xf32>
    %64 = arith.addf %55, %63 : vector<8x128xf32>
    %65 = arith.addf %60, %8 : vector<8x128xf32>
    %cst_30 = arith.constant 1.000000e+00 : f32
    %66 = vector.broadcast %cst_30 : f32 to vector<8x128xf32>
    %67 = arith.cmpf oge, %65, %66 : vector<8x128xf32>
    %cst_31 = arith.constant 0.000000e+00 : f32
    %68 = vector.broadcast %cst_31 : f32 to vector<8x128xf32>
    %69 = arith.select %67, %68, %65 : vector<8x128xi1>, vector<8x128xf32>
    %cst_32 = arith.constant 6.400000e+01 : f32
    %cst_33 = arith.constant 0.000000e+00 : f32
    %70 = vector.broadcast %cst_32 : f32 to vector<8x128xf32>
    %71 = vector.broadcast %cst_33 : f32 to vector<8x128xf32>
    %72 = arith.select %67, %70, %71 : vector<8x128xi1>, vector<8x128xf32>
    %73 = arith.addf %64, %72 : vector<8x128xf32>
    %74 = arith.addf %69, %8 : vector<8x128xf32>
    %cst_34 = arith.constant 1.000000e+00 : f32
    %75 = vector.broadcast %cst_34 : f32 to vector<8x128xf32>
    %76 = arith.cmpf oge, %74, %75 : vector<8x128xf32>
    %cst_35 = arith.constant 0.000000e+00 : f32
    %77 = vector.broadcast %cst_35 : f32 to vector<8x128xf32>
    %78 = arith.select %76, %77, %74 : vector<8x128xi1>, vector<8x128xf32>
    %cst_36 = arith.constant 1.280000e+02 : f32
    %cst_37 = arith.constant 0.000000e+00 : f32
    %79 = vector.broadcast %cst_36 : f32 to vector<8x128xf32>
    %80 = vector.broadcast %cst_37 : f32 to vector<8x128xf32>
    %81 = arith.select %76, %79, %80 : vector<8x128xi1>, vector<8x128xf32>
    %82 = arith.addf %73, %81 : vector<8x128xf32>
    %83 = arith.addf %78, %8 : vector<8x128xf32>
    %cst_38 = arith.constant 1.000000e+00 : f32
    %84 = vector.broadcast %cst_38 : f32 to vector<8x128xf32>
    %85 = arith.cmpf oge, %83, %84 : vector<8x128xf32>
    %cst_39 = arith.constant 0.000000e+00 : f32
    %86 = vector.broadcast %cst_39 : f32 to vector<8x128xf32>
    %87 = arith.select %85, %86, %83 : vector<8x128xi1>, vector<8x128xf32>
    %cst_40 = arith.constant 2.560000e+02 : f32
    %cst_41 = arith.constant 0.000000e+00 : f32
    %88 = vector.broadcast %cst_40 : f32 to vector<8x128xf32>
    %89 = vector.broadcast %cst_41 : f32 to vector<8x128xf32>
    %90 = arith.select %85, %88, %89 : vector<8x128xi1>, vector<8x128xf32>
    %91 = arith.addf %82, %90 : vector<8x128xf32>
    %92 = arith.addf %87, %8 : vector<8x128xf32>
    %cst_42 = arith.constant 1.000000e+00 : f32
    %93 = vector.broadcast %cst_42 : f32 to vector<8x128xf32>
    %94 = arith.cmpf oge, %92, %93 : vector<8x128xf32>
    %cst_43 = arith.constant 0.000000e+00 : f32
    %95 = vector.broadcast %cst_43 : f32 to vector<8x128xf32>
    %96 = arith.select %94, %95, %92 : vector<8x128xi1>, vector<8x128xf32>
    %cst_44 = arith.constant 5.120000e+02 : f32
    %cst_45 = arith.constant 0.000000e+00 : f32
    %97 = vector.broadcast %cst_44 : f32 to vector<8x128xf32>
    %98 = vector.broadcast %cst_45 : f32 to vector<8x128xf32>
    %99 = arith.select %94, %97, %98 : vector<8x128xi1>, vector<8x128xf32>
    %100 = arith.addf %91, %99 : vector<8x128xf32>
    %101 = arith.addf %96, %8 : vector<8x128xf32>
    %cst_46 = arith.constant 1.000000e+00 : f32
    %102 = vector.broadcast %cst_46 : f32 to vector<8x128xf32>
    %103 = arith.cmpf oge, %101, %102 : vector<8x128xf32>
    %cst_47 = arith.constant 0.000000e+00 : f32
    %104 = vector.broadcast %cst_47 : f32 to vector<8x128xf32>
    %105 = arith.select %103, %104, %101 : vector<8x128xi1>, vector<8x128xf32>
    %cst_48 = arith.constant 1.024000e+03 : f32
    %cst_49 = arith.constant 0.000000e+00 : f32
    %106 = vector.broadcast %cst_48 : f32 to vector<8x128xf32>
    %107 = vector.broadcast %cst_49 : f32 to vector<8x128xf32>
    %108 = arith.select %103, %106, %107 : vector<8x128xi1>, vector<8x128xf32>
    %109 = arith.addf %100, %108 : vector<8x128xf32>
    %110 = arith.addf %105, %8 : vector<8x128xf32>
    %cst_50 = arith.constant 1.000000e+00 : f32
    %111 = vector.broadcast %cst_50 : f32 to vector<8x128xf32>
    %112 = arith.cmpf oge, %110, %111 : vector<8x128xf32>
    %cst_51 = arith.constant 0.000000e+00 : f32
    %113 = vector.broadcast %cst_51 : f32 to vector<8x128xf32>
    %114 = arith.select %112, %113, %110 : vector<8x128xi1>, vector<8x128xf32>
    %cst_52 = arith.constant 2.048000e+03 : f32
    %cst_53 = arith.constant 0.000000e+00 : f32
    %115 = vector.broadcast %cst_52 : f32 to vector<8x128xf32>
    %116 = vector.broadcast %cst_53 : f32 to vector<8x128xf32>
    %117 = arith.select %112, %115, %116 : vector<8x128xi1>, vector<8x128xf32>
    %118 = arith.addf %109, %117 : vector<8x128xf32>
    %119 = arith.addf %114, %8 : vector<8x128xf32>
    %cst_54 = arith.constant 1.000000e+00 : f32
    %120 = vector.broadcast %cst_54 : f32 to vector<8x128xf32>
    %121 = arith.cmpf oge, %119, %120 : vector<8x128xf32>
    %cst_55 = arith.constant 0.000000e+00 : f32
    %122 = vector.broadcast %cst_55 : f32 to vector<8x128xf32>
    %123 = arith.select %121, %122, %119 : vector<8x128xi1>, vector<8x128xf32>
    %cst_56 = arith.constant 4.096000e+03 : f32
    %cst_57 = arith.constant 0.000000e+00 : f32
    %124 = vector.broadcast %cst_56 : f32 to vector<8x128xf32>
    %125 = vector.broadcast %cst_57 : f32 to vector<8x128xf32>
    %126 = arith.select %121, %124, %125 : vector<8x128xi1>, vector<8x128xf32>
    %127 = arith.addf %118, %126 : vector<8x128xf32>
    %128 = arith.addf %123, %8 : vector<8x128xf32>
    %cst_58 = arith.constant 1.000000e+00 : f32
    %129 = vector.broadcast %cst_58 : f32 to vector<8x128xf32>
    %130 = arith.cmpf oge, %128, %129 : vector<8x128xf32>
    %cst_59 = arith.constant 0.000000e+00 : f32
    %131 = vector.broadcast %cst_59 : f32 to vector<8x128xf32>
    %132 = arith.select %130, %131, %128 : vector<8x128xi1>, vector<8x128xf32>
    %cst_60 = arith.constant 8.192000e+03 : f32
    %cst_61 = arith.constant 0.000000e+00 : f32
    %133 = vector.broadcast %cst_60 : f32 to vector<8x128xf32>
    %134 = vector.broadcast %cst_61 : f32 to vector<8x128xf32>
    %135 = arith.select %130, %133, %134 : vector<8x128xi1>, vector<8x128xf32>
    %136 = arith.addf %127, %135 : vector<8x128xf32>
    %137 = arith.addf %132, %8 : vector<8x128xf32>
    %cst_62 = arith.constant 1.000000e+00 : f32
    %138 = vector.broadcast %cst_62 : f32 to vector<8x128xf32>
    %139 = arith.cmpf oge, %137, %138 : vector<8x128xf32>
    %cst_63 = arith.constant 0.000000e+00 : f32
    %140 = vector.broadcast %cst_63 : f32 to vector<8x128xf32>
    %141 = arith.select %139, %140, %137 : vector<8x128xi1>, vector<8x128xf32>
    %cst_64 = arith.constant 1.638400e+04 : f32
    %cst_65 = arith.constant 0.000000e+00 : f32
    %142 = vector.broadcast %cst_64 : f32 to vector<8x128xf32>
    %143 = vector.broadcast %cst_65 : f32 to vector<8x128xf32>
    %144 = arith.select %139, %142, %143 : vector<8x128xi1>, vector<8x128xf32>
    %145 = arith.addf %136, %144 : vector<8x128xf32>
    %146 = arith.addf %141, %8 : vector<8x128xf32>
    %cst_66 = arith.constant 1.000000e+00 : f32
    %147 = vector.broadcast %cst_66 : f32 to vector<8x128xf32>
    %148 = arith.cmpf oge, %146, %147 : vector<8x128xf32>
    %cst_67 = arith.constant 3.276800e+04 : f32
    %cst_68 = arith.constant 0.000000e+00 : f32
    %149 = vector.broadcast %cst_67 : f32 to vector<8x128xf32>
    %150 = vector.broadcast %cst_68 : f32 to vector<8x128xf32>
    %151 = arith.select %148, %149, %150 : vector<8x128xi1>, vector<8x128xf32>
    %152 = arith.addf %145, %151 : vector<8x128xf32>
    %cst_69 = arith.constant 1.52587891E-5 : f32
    %153 = vector.broadcast %cst_69 : f32 to vector<8x128xf32>
    %154 = arith.mulf %152, %153 : vector<8x128xf32>
    %c0_70 = arith.constant 0 : index
    %c0_71 = arith.constant 0 : index
    %155 = vector.load %arg4[%c0_70, %c0_71] : memref<128x512xf32, #tpu.memory_space<vmem>>, vector<128x512xf32>
    %cst_72 = arith.constant dense<0.000000e+00> : vector<8x512xf32>
    %156 = tpu.matmul %154, %155, %cst_72 {dimension_numbers = #tpu.dot_dimension_numbers<[1], [0], [0], [1], [0, 0, 1, 1], [], []>} : vector<8x128xf32>, vector<128x512xf32>, vector<8x512xf32> -> vector<8x512xf32>
    %c0_73 = arith.constant 0 : index
    %c0_74 = arith.constant 0 : index
    %157 = vector.load %arg5[%c0_73, %c0_74] : memref<1x512xf32, #tpu.memory_space<vmem>>, vector<1x512xf32>
    %158 = vector.broadcast %157 : vector<1x512xf32> to vector<8x512xf32>
    %159 = arith.addf %156, %158 : vector<8x512xf32>
    %160 = arith.index_cast %1 : i32 to index
    %c0_75 = arith.constant 0 : index
    %161 = vector.load %arg6[%160, %c0_75] : memref<8x512xf32, #tpu.memory_space<vmem>>, vector<8x512xf32>
    tpu.vector_store %arg6[%160, %c0_75], %159 {strides = array<i32>} : memref<8x512xf32, #tpu.memory_space<vmem>>, vector<8x512xf32>,
    %c1_i32 = arith.constant 1 : i32
    return
  }
  func.func @transform_0(%arg0: i32) -> (i32, i32) {
    %c0_i32 = arith.constant 0 : i32
    %c0_i32_0 = arith.constant 0 : i32
    return %arg0, %c0_i32 : i32, i32
  }
  func.func @transform_1(%arg0: i32) -> (i32, i32) {
    %c0_i32 = arith.constant 0 : i32
    %c0_i32_0 = arith.constant 0 : i32
    %c0_i32_1 = arith.constant 0 : i32
    return %c0_i32, %c0_i32_0 : i32, i32
  }
  func.func @transform_2(%arg0: i32) -> (i32, i32) {
    %c0_i32 = arith.constant 0 : i32
    %c0_i32_0 = arith.constant 0 : i32
    %c0_i32_1 = arith.constant 0 : i32
    return %c0_i32, %c0_i32_0 : i32, i32
  }
  func.func @transform_3(%arg0: i32) -> (i32, i32) {
    %c0_i32 = arith.constant 0 : i32
    %c0_i32_0 = arith.constant 0 : i32
    %c0_i32_1 = arith.constant 0 : i32
    return %c0_i32, %c0_i32_0 : i32, i32
  }
  func.func @transform_4(%arg0: i32) -> (i32, i32) {
    %c0_i32 = arith.constant 0 : i32
    %c0_i32_0 = arith.constant 0 : i32
    %c0_i32_1 = arith.constant 0 : i32
    return %c0_i32, %c0_i32_0 : i32, i32
  }
  func.func @transform_5(%arg0: i32) -> (i32, i32) {
    %c0_i32 = arith.constant 0 : i32
    %c0_i32_0 = arith.constant 0 : i32
    return %arg0, %c0_i32 : i32, i32
  }
}

</mosaic_0001>

<llo_original>
// kernel: tpu_custom_call.1
$region0: #{tpu_custom_call.1}
  #allocation0 [shape = 'u32[]', space=smem, size = 0x4, offset = 0x4, fixed_abs, tag = 'smem constant byte address 0x4 - core index']
  #allocation1 [shape = 'u32[72,128]{1,0:T(1,128)}', space=vmem, size = 0x9000, scoped, tag = 'internal scratch']
  %s0 = inlined_call_operand.hbm [shape: f32[8,16], index: 0, kind: input, shape index: {}]
  %s1 = inlined_call_operand.hbm [shape: f32[16,128], index: 1, kind: input, shape index: {}]
  %s2 = inlined_call_operand.vmem [shape: f32[1,128], index: 2, kind: input, shape index: {}]
  %s3 = inlined_call_operand.hbm [shape: f32[128,512], index: 3, kind: input, shape index: {}]
  %s4 = inlined_call_operand.hbm [shape: f32[1,512], index: 4, kind: input, shape index: {}]
  %s5 = inlined_call_operand.hbm [shape: f32[8,512], index: 5, kind: output, shape index: {}]
  %s6 = sld [smem:[#allocation0]]
  $region46: #{tpu_custom_call.1} parent=0
    _
  %s8 = ssub.s32 1, %s6
  %s9 = scalar_select 0, %s8, %s6
  $region1: #{tpu_custom_call.1} parent=0
    #allocation2 [shape = 'u8[4096]{0}', space=vmem, size = 0x1000, scoped, tag = 'input window, operand 0, single buffered']
    #allocation3 [shape = 's32[1]{0}', space=sflag, size = 0x4, scoped, tag = 'scoped memory for tpu_custom_call.1']
    #allocation4 [shape = 's32[1]{0}', space=sflag, size = 0x4, scoped, tag = 'scoped memory for tpu_custom_call.1']
    #allocation5 [shape = 'u8[8192]{0}', space=vmem, size = 0x2000, scoped, tag = 'input window, operand 1, single buffered']
    #allocation6 [shape = 's32[1]{0}', space=sflag, size = 0x4, scoped, tag = 'scoped memory for tpu_custom_call.1']
    #allocation7 [shape = 'u8[262144]{0}', space=vmem, size = 0x40000, scoped, tag = 'input window, operand 3, single buffered']
    #allocation8 [shape = 'u8[2048]{0}', space=vmem, size = 0x800, scoped, tag = 'input window, operand 4, single buffered']
    #allocation9 [shape = 's32[1]{0}', space=sflag, size = 0x4, scoped, tag = 'scoped memory for tpu_custom_call.1']
    #allocation10 [shape = 'u8[16384]{0}', space=vmem, size = 0x4000, scoped, tag = 'output window, operand 0, single buffered']
    %10 = vsyncpa [#allocation3], 0
    %11 = vsyncpa [#allocation6], 0
    %12 = vsyncpa [#allocation9], 0
    %13 = vsyncpa [#allocation4], 0
    // Predicated region
    $region2: #{tpu_custom_call.1} parent=1 // pred_check
      _
    $region3: #{tpu_custom_call.1} parent=1 // pred_check_branch
      %15 = sbr.rel (0) target = $region5
    $region4: #{tpu_custom_call.1} parent=1 // pred_region
      %17 = vsyncadd [#allocation3], 0
      %s19 = sshll.u32 %s0, 4
      %s20 = int_to_ptr.hbm [resolvable:$true] %s19
      %s21 = sshll.u32 [#allocation2], 4
      %s22 = int_to_ptr.vmem [resolvable:$true] %s21
      %24 = dma.hbm_to_vmem [thread:$0]  %s20, 128, %s22, [#allocation3]
    $region5: #{tpu_custom_call.1} parent=1 // pred_fallthru
      _
    // Predicated region
    $region6: #{tpu_custom_call.1} parent=1 // pred_check
      _
    $region7: #{tpu_custom_call.1} parent=1 // pred_check_branch
      %26 = sbr.rel (0) target = $region9
    $region8: #{tpu_custom_call.1} parent=1 // pred_region
      %28 = vsyncadd [#allocation6], 0
      %s29 = sshll.u32 %s1, 4
      %s30 = int_to_ptr.hbm [resolvable:$true] %s29
      %s31 = sshll.u32 [#allocation5], 4
      %s32 = int_to_ptr.vmem [resolvable:$true] %s31
      %37 = dma.hbm_to_vmem [thread:$0]  %s30, 256, %s32, [#allocation6], 128, 128, 8
    $region9: #{tpu_custom_call.1} parent=1 // pred_fallthru
      _
    // Predicated region
    $region10: #{tpu_custom_call.1} parent=1 // pred_check
      _
    $region11: #{tpu_custom_call.1} parent=1 // pred_check_branch
      %39 = sbr.rel (0) target = $region13
    $region12: #{tpu_custom_call.1} parent=1 // pred_region
      _
    $region13: #{tpu_custom_call.1} parent=1 // pred_fallthru
      _
    // Predicated region
    $region14: #{tpu_custom_call.1} parent=1 // pred_check
      _
    $region15: #{tpu_custom_call.1} parent=1 // pred_check_branch
      %41 = sbr.rel (0) target = $region17
    $region16: #{tpu_custom_call.1} parent=1 // pred_region
      %43 = vsyncadd [#allocation6], 0
      %s44 = sshll.u32 %s3, 4
      %s45 = int_to_ptr.hbm [resolvable:$true] %s44
      %s46 = sshll.u32 [#allocation7], 4
      %s47 = int_to_ptr.vmem [resolvable:$true] %s46
      %52 = dma.hbm_to_vmem [thread:$0]  %s45, 8192, %s47, [#allocation6], 512, 512, 32
    $region17: #{tpu_custom_call.1} parent=1 // pred_fallthru
      _
    // Predicated region
    $region18: #{tpu_custom_call.1} parent=1 // pred_check
      _
    $region19: #{tpu_custom_call.1} parent=1 // pred_check_branch
      %54 = sbr.rel (0) target = $region21
    $region20: #{tpu_custom_call.1} parent=1 // pred_region
      %56 = vsyncadd [#allocation9], 0
      %s58 = sshll.u32 %s4, 4
      %s59 = int_to_ptr.hbm [resolvable:$true] %s58
      %s60 = sshll.u32 [#allocation8], 4
      %s61 = int_to_ptr.vmem [resolvable:$true] %s60
      %63 = dma.hbm_to_vmem [thread:$0]  %s59, 64, %s61, [#allocation9]
    $region21: #{tpu_custom_call.1} parent=1 // pred_fallthru
      _
    // Predicated region
    $region22: #{tpu_custom_call.1} parent=1 // pred_check
      _
    $region23: #{tpu_custom_call.1} parent=1 // pred_check_branch
      %65 = sbr.rel (0) target = $region25
    $region24: #{tpu_custom_call.1} parent=1 // pred_region
      %67 = dma.done [#allocation3], 128
    $region25: #{tpu_custom_call.1} parent=1 // pred_fallthru
      _
    // Predicated region
    $region26: #{tpu_custom_call.1} parent=1 // pred_check
      _
    $region27: #{tpu_custom_call.1} parent=1 // pred_check_branch
      %69 = sbr.rel (0) target = $region29
    $region28: #{tpu_custom_call.1} parent=1 // pred_region
      %71 = dma.done [#allocation6], 256
    $region29: #{tpu_custom_call.1} parent=1 // pred_fallthru
      _
    // Predicated region
    $region30: #{tpu_custom_call.1} parent=1 // pred_check
      _
    $region31: #{tpu_custom_call.1} parent=1 // pred_check_branch
      %73 = sbr.rel (0) target = $region33
    $region32: #{tpu_custom_call.1} parent=1 // pred_region
      %75 = dma.done [#allocation6], 8192
    $region33: #{tpu_custom_call.1} parent=1 // pred_fallthru
      _
    // Predicated region
    $region34: #{tpu_custom_call.1} parent=1 // pred_check
      _
    $region35: #{tpu_custom_call.1} parent=1 // pred_check_branch
      %77 = sbr.rel (0) target = $region37
    $region36: #{tpu_custom_call.1} parent=1 // pred_region
      %79 = dma.done [#allocation9], 64
    $region37: #{tpu_custom_call.1} parent=1 // pred_fallthru
      _
    %v80 = vld [vmem:[#allocation2] sm:$0xff]
    %v81 = vld [vmem:[#allocation5] sm:$0xff]
    %v82 = vld [vmem:[#allocation5 + $0x8] sm:$0xff]
    %v83 = vld [vmem:[%s2] sm:$0x1]
    %v85 = vperm.slane %v83, 0
    %vm87 = vcmask 130048
    %v89 = vsel %vm87, %v80, 0
    %91 = vmatpush.msra.mxu0 0.0
    %92 = vmatpush.msra.mxu0 0.0
    %93 = vmatpush.msra.mxu0 0.0
    %94 = vmatpush.msra.mxu0 0.0
    %95 = vmatpush.msra.mxu0 0.0
    %96 = vmatpush.msra.mxu0 0.0
    %97 = vmatpush.msra.mxu0 0.0
    %98 = vmatpush.msra.mxu0 0.0
    %99 = vmatpush.msra.mxu0 0.0
    %100 = vmatpush.msra.mxu0 0.0
    %101 = vmatpush.msra.mxu0 0.0
    %102 = vmatpush.msra.mxu0 0.0
    %103 = vmatpush.msra.mxu0 0.0
    %104 = vmatpush.msra.mxu0 0.0
    %105 = vmatpush.msra.mxu0 %v82
    %106 = vmatpush.msra.mxu0 %v81
    %107 = vmatmul.f32.gmra.mxu0 %v89
    %v108 = vpop.f32.mrf.mxu0
    %v109 = vadd.f32 %v85, %v108
    %110 = vdwg.mxu0
    %v111 = vadd.f32 %v109, 0.0
    %vm112 = vcmp.ge.f32.partialorder %v111, 1.0
    %v113 = vsel %vm112, 0.0, %v111
    %v114 = vsel %vm112, 1.0, 0.0
    %v115 = vadd.f32 %v114, 0.0
    %v116 = vadd.f32 %v113, %v109
    %vm117 = vcmp.ge.f32.partialorder %v116, 1.0
    %v118 = vsel %vm117, 0.0, %v116
    %v119 = vsel %vm117, 2.0, 0.0
    %v120 = vadd.f32 %v115, %v119
    %v121 = vadd.f32 %v118, %v109
    %vm122 = vcmp.ge.f32.partialorder %v121, 1.0
    %v123 = vsel %vm122, 0.0, %v121
    %v124 = vsel %vm122, 4.0, 0.0
    %v125 = vadd.f32 %v120, %v124
    %v126 = vadd.f32 %v123, %v109
    %vm127 = vcmp.ge.f32.partialorder %v126, 1.0
    %v128 = vsel %vm127, 0.0, %v126
    %v129 = vsel %vm127, 8.0, 0.0
    %v130 = vadd.f32 %v125, %v129
    %v131 = vadd.f32 %v128, %v109
    %vm132 = vcmp.ge.f32.partialorder %v131, 1.0
    %v133 = vsel %vm132, 0.0, %v131
    %v134 = vsel %vm132, 16.0, 0.0
    %v135 = vadd.f32 %v130, %v134
    %v136 = vadd.f32 %v133, %v109
    %vm137 = vcmp.ge.f32.partialorder %v136, 1.0
    %v138 = vsel %vm137, 0.0, %v136
    %v139 = vsel %vm137, 32.0, 0.0
    %v140 = vadd.f32 %v135, %v139
    %v141 = vadd.f32 %v138, %v109
    %vm142 = vcmp.ge.f32.partialorder %v141, 1.0
    %v143 = vsel %vm142, 0.0, %v141
    %v144 = vsel %vm142, 64.0, 0.0
    %v145 = vadd.f32 %v140, %v144
    %v146 = vadd.f32 %v143, %v109
    %vm147 = vcmp.ge.f32.partialorder %v146, 1.0
    %v148 = vsel %vm147, 0.0, %v146
    %v149 = vsel %vm147, 128.0, 0.0
    %v150 = vadd.f32 %v145, %v149
    %v151 = vadd.f32 %v148, %v109
    %vm152 = vcmp.ge.f32.partialorder %v151, 1.0
    %v153 = vsel %vm152, 0.0, %v151
    %v154 = vsel %vm152, 256.0, 0.0
    %v155 = vadd.f32 %v150, %v154
    %v156 = vadd.f32 %v153, %v109
    %vm157 = vcmp.ge.f32.partialorder %v156, 1.0
    %v158 = vsel %vm157, 0.0, %v156
    %v159 = vsel %vm157, 512.0, 0.0
    %v160 = vadd.f32 %v155, %v159
    %v161 = vadd.f32 %v158, %v109
    %vm162 = vcmp.ge.f32.partialorder %v161, 1.0
    %v163 = vsel %vm162, 0.0, %v161
    %v164 = vsel %vm162, 1024.0, 0.0
    %v165 = vadd.f32 %v160, %v164
    %v166 = vadd.f32 %v163, %v109
    %vm167 = vcmp.ge.f32.partialorder %v166, 1.0
    %v168 = vsel %vm167, 0.0, %v166
    %v169 = vsel %vm167, 2048.0, 0.0
    %v170 = vadd.f32 %v165, %v169
    %v171 = vadd.f32 %v168, %v109
    %vm172 = vcmp.ge.f32.partialorder %v171, 1.0
    %v173 = vsel %vm172, 0.0, %v171
    %v174 = vsel %vm172, 4096.0, 0.0
    %v175 = vadd.f32 %v170, %v174
    %v176 = vadd.f32 %v173, %v109
    %vm177 = vcmp.ge.f32.partialorder %v176, 1.0
    %v178 = vsel %vm177, 0.0, %v176
    %v179 = vsel %vm177, 8192.0, 0.0
    %v180 = vadd.f32 %v175, %v179
    %v181 = vadd.f32 %v178, %v109
    %vm182 = vcmp.ge.f32.partialorder %v181, 1.0
    %v183 = vsel %vm182, 0.0, %v181
    %v184 = vsel %vm182, 16384.0, 0.0
    %v185 = vadd.f32 %v180, %v184
    %v186 = vadd.f32 %v183, %v109
    %vm187 = vcmp.ge.f32.partialorder %v186, 1.0
    %v188 = vsel %vm187, 32768.0, 0.0
    %v189 = vadd.f32 %v185, %v188
    %v190 = vmul.f32 %v189, 1.5258789e-05
    %v191 = vld [vmem:[#allocation7] sm:$0xff]
    %v192 = vld [vmem:[#allocation7 + $0x8] sm:$0xff]
    %v193 = vld [vmem:[#allocation7 + $0x10] sm:$0xff]
    %v194 = vld [vmem:[#allocation7 + $0x18] sm:$0xff]
    %v195 = vld [vmem:[#allocation7 + $0x20] sm:$0xff]
    %v196 = vld [vmem:[#allocation7 + $0x28] sm:$0xff]
    %v197 = vld [vmem:[#allocation7 + $0x30] sm:$0xff]
    %v198 = vld [vmem:[#allocation7 + $0x38] sm:$0xff]
    %v199 = vld [vmem:[#allocation7 + $0x40] sm:$0xff]
    %v200 = vld [vmem:[#allocation7 + $0x48] sm:$0xff]
    %v201 = vld [vmem:[#allocation7 + $0x50] sm:$0xff]
    %v202 = vld [vmem:[#allocation7 + $0x58] sm:$0xff]
    %v203 = vld [vmem:[#allocation7 + $0x60] sm:$0xff]
    %v204 = vld [vmem:[#allocation7 + $0x68] sm:$0xff]
    %v205 = vld [vmem:[#allocation7 + $0x70] sm:$0xff]
    %v206 = vld [vmem:[#allocation7 + $0x78] sm:$0xff]
    %v207 = vld [vmem:[#allocation7 + $0x80] sm:$0xff]
    %v208 = vld [vmem:[#allocation7 + $0x88] sm:$0xff]
    %v209 = vld [vmem:[#allocation7 + $0x90] sm:$0xff]
    %v210 = vld [vmem:[#allocation7 + $0x98] sm:$0xff]
    %v211 = vld [vmem:[#allocation7 + $0xa0] sm:$0xff]
    %v212 = vld [vmem:[#allocation7 + $0xa8] sm:$0xff]
    %v213 = vld [vmem:[#allocation7 + $0xb0] sm:$0xff]
    %v214 = vld [vmem:[#allocation7 + $0xb8] sm:$0xff]
    %v215 = vld [vmem:[#allocation7 + $0xc0] sm:$0xff]
    %v216 = vld [vmem:[#allocation7 + $0xc8] sm:$0xff]
    %v217 = vld [vmem:[#allocation7 + $0xd0] sm:$0xff]
    %v218 = vld [vmem:[#allocation7 + $0xd8] sm:$0xff]
    %v219 = vld [vmem:[#allocation7 + $0xe0] sm:$0xff]
    %v220 = vld [vmem:[#allocation7 + $0xe8] sm:$0xff]
    %v221 = vld [vmem:[#allocation7 + $0xf0] sm:$0xff]
    %v222 = vld [vmem:[#allocation7 + $0xf8] sm:$0xff]
    %v223 = vld [vmem:[#allocation7 + $0x100] sm:$0xff]
    %v224 = vld [vmem:[#allocation7 + $0x108] sm:$0xff]
    %v225 = vld [vmem:[#allocation7 + $0x110] sm:$0xff]
    %v226 = vld [vmem:[#allocation7 + $0x118] sm:$0xff]
    %v227 = vld [vmem:[#allocation7 + $0x120] sm:$0xff]
    %v228 = vld [vmem:[#allocation7 + $0x128] sm:$0xff]
    %v229 = vld [vmem:[#allocation7 + $0x130] sm:$0xff]
    %v230 = vld [vmem:[#allocation7 + $0x138] sm:$0xff]
    %v231 = vld [vmem:[#allocation7 + $0x140] sm:$0xff]
    %v232 = vld [vmem:[#allocation7 + $0x148] sm:$0xff]
    %v233 = vld [vmem:[#allocation7 + $0x150] sm:$0xff]
    %v234 = vld [vmem:[#allocation7 + $0x158] sm:$0xff]
    %v235 = vld [vmem:[#allocation7 + $0x160] sm:$0xff]
    %v236 = vld [vmem:[#allocation7 + $0x168] sm:$0xff]
    %v237 = vld [vmem:[#allocation7 + $0x170] sm:$0xff]
    %v238 = vld [vmem:[#allocation7 + $0x178] sm:$0xff]
    %v239 = vld [vmem:[#allocation7 + $0x180] sm:$0xff]
    %v240 = vld [vmem:[#allocation7 + $0x188] sm:$0xff]
    %v241 = vld [vmem:[#allocation7 + $0x190] sm:$0xff]
    %v242 = vld [vmem:[#allocation7 + $0x198] sm:$0xff]
    %v243 = vld [vmem:[#allocation7 + $0x1a0] sm:$0xff]
    %v244 = vld [vmem:[#allocation7 + $0x1a8] sm:$0xff]
    %v245 = vld [vmem:[#allocation7 + $0x1b0] sm:$0xff]
    %v246 = vld [vmem:[#allocation7 + $0x1b8] sm:$0xff]
    %v247 = vld [vmem:[#allocation7 + $0x1c0] sm:$0xff]
    %v248 = vld [vmem:[#allocation7 + $0x1c8] sm:$0xff]
    %v249 = vld [vmem:[#allocation7 + $0x1d0] sm:$0xff]
    %v250 = vld [vmem:[#allocation7 + $0x1d8] sm:$0xff]
    %v251 = vld [vmem:[#allocation7 + $0x1e0] sm:$0xff]
    %v252 = vld [vmem:[#allocation7 + $0x1e8] sm:$0xff]
    %v253 = vld [vmem:[#allocation7 + $0x1f0] sm:$0xff]
    %v254 = vld [vmem:[#allocation7 + $0x1f8] sm:$0xff]
    %v255 = vld [vmem:[#allocation8] sm:$0xf]
    %v257 = vperm.slane %v255, 0
    %v258 = vperm.slane %v255, 1
    %v259 = vperm.slane %v255, 2
    %v260 = vperm.slane %v255, 3
    %265 = vmatpush.msra.mxu0 %v251
    %266 = vmatpush.msra.mxu0 %v247
    %267 = vmatpush.msra.mxu0 %v243
    %268 = vmatpush.msra.mxu0 %v239
    %269 = vmatpush.msra.mxu0 %v235
    %270 = vmatpush.msra.mxu0 %v231
    %271 = vmatpush.msra.mxu0 %v227
    %272 = vmatpush.msra.mxu0 %v223
    %273 = vmatpush.msra.mxu0 %v219
    %274 = vmatpush.msra.mxu0 %v215
    %275 = vmatpush.msra.mxu0 %v211
    %276 = vmatpush.msra.mxu0 %v207
    %277 = vmatpush.msra.mxu0 %v203
    %278 = vmatpush.msra.mxu0 %v199
    %279 = vmatpush.msra.mxu0 %v195
    %280 = vmatpush.msra.mxu0 %v191
    %281 = vmatmul.f32.gmra.mxu0 %v190
    %v282 = vpop.f32.mrf.mxu0
    %v283 = vadd.f32 %v257, %v282
    %284 = vdwg.mxu0
    %285 = vmatpush.msra.mxu0 %v252
    %286 = vmatpush.msra.mxu0 %v248
    %287 = vmatpush.msra.mxu0 %v244
    %288 = vmatpush.msra.mxu0 %v240
    %289 = vmatpush.msra.mxu0 %v236
    %290 = vmatpush.msra.mxu0 %v232
    %291 = vmatpush.msra.mxu0 %v228
    %292 = vmatpush.msra.mxu0 %v224
    %293 = vmatpush.msra.mxu0 %v220
    %294 = vmatpush.msra.mxu0 %v216
    %295 = vmatpush.msra.mxu0 %v212
    %296 = vmatpush.msra.mxu0 %v208
    %297 = vmatpush.msra.mxu0 %v204
    %298 = vmatpush.msra.mxu0 %v200
    %299 = vmatpush.msra.mxu0 %v196
    %300 = vmatpush.msra.mxu0 %v192
    %301 = vmatmul.f32.gmra.mxu0 %v190
    %v302 = vpop.f32.mrf.mxu0
    %v303 = vadd.f32 %v258, %v302
    %304 = vdwg.mxu0
    %305 = vmatpush.msra.mxu0 %v253
    %306 = vmatpush.msra.mxu0 %v249
    %307 = vmatpush.msra.mxu0 %v245
    %308 = vmatpush.msra.mxu0 %v241
    %309 = vmatpush.msra.mxu0 %v237
    %310 = vmatpush.msra.mxu0 %v233
    %311 = vmatpush.msra.mxu0 %v229
    %312 = vmatpush.msra.mxu0 %v225
    %313 = vmatpush.msra.mxu0 %v221
    %314 = vmatpush.msra.mxu0 %v217
    %315 = vmatpush.msra.mxu0 %v213
    %316 = vmatpush.msra.mxu0 %v209
    %317 = vmatpush.msra.mxu0 %v205
    %318 = vmatpush.msra.mxu0 %v201
    %319 = vmatpush.msra.mxu0 %v197
    %320 = vmatpush.msra.mxu0 %v193
    %321 = vmatmul.f32.gmra.mxu0 %v190
    %v322 = vpop.f32.mrf.mxu0
    %v323 = vadd.f32 %v259, %v322
    %324 = vdwg.mxu0
    %325 = vmatpush.msra.mxu0 %v254
    %326 = vmatpush.msra.mxu0 %v250
    %327 = vmatpush.msra.mxu0 %v246
    %328 = vmatpush.msra.mxu0 %v242
    %329 = vmatpush.msra.mxu0 %v238
    %330 = vmatpush.msra.mxu0 %v234
    %331 = vmatpush.msra.mxu0 %v230
    %332 = vmatpush.msra.mxu0 %v226
    %333 = vmatpush.msra.mxu0 %v222
    %334 = vmatpush.msra.mxu0 %v218
    %335 = vmatpush.msra.mxu0 %v214
    %336 = vmatpush.msra.mxu0 %v210
    %337 = vmatpush.msra.mxu0 %v206
    %338 = vmatpush.msra.mxu0 %v202
    %339 = vmatpush.msra.mxu0 %v198
    %340 = vmatpush.msra.mxu0 %v194
    %341 = vmatmul.f32.gmra.mxu0 %v190
    %v342 = vpop.f32.mrf.mxu0
    %v343 = vadd.f32 %v260, %v342
    %344 = vdwg.mxu0
    %s345 = smul.u32 0, 4
    %s346 = smul.addr %s345, 8
    %s347 = scalar_lea.vmem [#allocation10], %s346
    %348 = vst [vmem:[%s347] sm:$0xff] %v283
    %349 = vst [vmem:[%s347 + $0x8] sm:$0xff] %v303
    %350 = vst [vmem:[%s347 + $0x10] sm:$0xff] %v323
    %351 = vst [vmem:[%s347 + $0x18] sm:$0xff] %v343
    // Predicated region
    $region38: #{tpu_custom_call.1} parent=1 // pred_check
      _
    $region39: #{tpu_custom_call.1} parent=1 // pred_check_branch
      %353 = sbr.rel (0) target = $region41
    $region40: #{tpu_custom_call.1} parent=1 // pred_region
      %355 = vsyncadd [#allocation4], 0
      %s357 = sshll.u32 [#allocation10], 4
      %s358 = int_to_ptr.vmem [resolvable:$true] %s357
      %s359 = sshll.u32 %s5, 4
      %s360 = int_to_ptr.hbm [resolvable:$true] %s359
      %362 = dma.vmem_to_hbm [thread:$0]  %s358, 512, %s360, [#allocation4]
    $region41: #{tpu_custom_call.1} parent=1 // pred_fallthru
      _
    // Predicated region
    $region42: #{tpu_custom_call.1} parent=1 // pred_check
      _
    $region43: #{tpu_custom_call.1} parent=1 // pred_check_branch
      %364 = sbr.rel (0) target = $region45
    $region44: #{tpu_custom_call.1} parent=1 // pred_region
      %366 = dma.done [#allocation4], 512
    $region45: #{tpu_custom_call.1} parent=1 // pred_fallthru
      _
    %367 = vsyncpa [#allocation3], 1
    %368 = vsyncpa [#allocation6], 1
    %369 = vsyncpa [#allocation9], 1
    %370 = vsyncpa [#allocation4], 1

</llo_original>
